<compile_context>
chip_gen: v5e
topology: v5e:2x2
jax: 0.10.0
libtpu: 0.0.40
codegen_flags: <defaults>
</compile_context>

<pallas_src>
import jax
import jax.numpy as jnp
from jax.experimental import pallas as pl
from jax.experimental.pallas import tpu as pltpu

LOGSTD_MIN = -10.0
LOGSTD_MAX = 2.0


def _ceil_to(x, m):
    return ((x + m - 1) // m) * m


def gaussian_bc_kernel(s_ref, w1_ref, b1_ref, w2_ref, b2_ref, w3_ref, b3_ref, mean_ref):
    # state tile arrives f32; cast to bf16 here (no separate wrapper-side cast pass)
    x = s_ref[...].astype(jnp.bfloat16)
    # layer 1: relu(x @ W1 + b1)  (K = state_dim is tiny; <5% of FLOPs, deliberately NOT padded)
    h1 = jnp.dot(x, w1_ref[...], preferred_element_type=jnp.float32)
    h1 = jnp.maximum(h1 + b1_ref[...], 0.0).astype(jnp.bfloat16)
    # layer 2: relu(h1 @ W2 + b2)  (512x512 bf16 -> dominant MXU work)
    h2 = jnp.dot(h1, w2_ref[...], preferred_element_type=jnp.float32)
    h2 = jnp.maximum(h2 + b2_ref[...], 0.0).astype(jnp.bfloat16)
    # mean head (padded to 128 lanes): tanh(h2 @ W3 + b3); bf16 lane-dense store (half the HBM write)
    m = jnp.dot(h2, w3_ref[...], preferred_element_type=jnp.float32)
    mean_ref[...] = jnp.tanh(m + b3_ref[...]).astype(mean_ref.dtype)


def init_params(key, state_dim, action_dim, hidden=512):
    """PyTorch nn.Linear-style init (uniform +/- 1/sqrt(fan_in)); W stored as (in, out)."""
    ks = jax.random.split(key, 6)

    def linear(kw, kb, fan_in, fan_out):
        bound = 1.0 / jnp.sqrt(jnp.float32(fan_in))
        w = jax.random.uniform(kw, (fan_in, fan_out), jnp.float32, -bound, bound)
        b = jax.random.uniform(kb, (fan_out,), jnp.float32, -bound, bound)
        return w, b

    w1, b1 = linear(ks[0], ks[1], state_dim, hidden)
    w2, b2 = linear(ks[2], ks[3], hidden, hidden)
    w3, b3 = linear(ks[4], ks[5], hidden, action_dim)
    log_std = jnp.zeros((action_dim,), jnp.float32)  # nn.Parameter(torch.zeros(action_dim))
    return (w1, b1, w2, b2, w3, b3, log_std)


def prepare_params(params):
    """One-time (per parameter update) prep so the forward path has zero per-call glue:
    bf16 weight casts, action head padded to AP lanes, (1,H)/(1,AP) f32 biases, and the
    state-independent std / scale_tril (log_std clamped to [-10, 2] exactly as in PyTorch)."""
    w1, b1, w2, b2, w3, b3, log_std = params
    S, H = w1.shape
    A = w3.shape[1]
    AP = _ceil_to(max(A, 1), 128)
    std = jnp.exp(jnp.clip(log_std.astype(jnp.float32), LOGSTD_MIN, LOGSTD_MAX))
    return {
        "w1": w1.astype(jnp.bfloat16),
        "b1": b1.astype(jnp.float32).reshape(1, H),
        "w2": w2.astype(jnp.bfloat16),
        "b2": b2.astype(jnp.float32).reshape(1, H),
        # zero-padded action columns: tanh(0 + 0) = 0, sliced away by the wrapper
        "w3": jnp.pad(w3.astype(jnp.bfloat16), ((0, 0), (0, AP - A))),
        "b3": jnp.pad(b3.astype(jnp.float32), (0, AP - A)).reshape(1, AP),
        "std": std,
        "scale_tril": jnp.diag(std),
        "S": S, "H": H, "A": A, "AP": AP,
    }


def _default_tile(batch):
    """>= 2 tiles whenever it matters (fills both v7x TCs under ("parallel",)); tiles up to
    1024 rows to amortize ~0.35 us per grid step; minimal batch padding. Same on v5e."""
    if batch <= 128:
        return max(8, _ceil_to(batch, 8))       # single tile; weight-DMA / launch bound anyway
    n_tiles = max(2, -(-batch // 1024))
    return _ceil_to(-(-batch // n_tiles), 8)


def gaussian_bc_forward(state, prepped, *, tb=None):
    """Returns (mean, std, scale_tril): the parameters of MultivariateNormal(mean, scale_tril)."""
    B, S = state.shape
    assert S == prepped["S"]
    H, A, AP = prepped["H"], prepped["A"], prepped["AP"]

    if tb is None:
        tb = _default_tile(B)
    Bp = _ceil_to(B, tb)
    x = state if Bp == B else jnp.pad(state, ((0, Bp - B), (0, 0)))  # pad rows: relu/tanh(0)=0

    # Weights/biases are VMEM-resident across grid steps (constant index_map); single-buffer
    # them since they are never re-fetched -> frees the dead second pipeline buffer.
    def resident(shape):
        return pl.BlockSpec(shape, lambda i: (0, 0), pipeline_mode=pl.Buffered(1))

    mean_p = pl.pallas_call(
        gaussian_bc_kernel,
        out_shape=jax.ShapeDtypeStruct((Bp, AP), jnp.bfloat16),   # bf16 output store
        grid=(Bp // tb,),
        in_specs=[
            pl.BlockSpec((tb, S), lambda i: (i, 0)),   # state: batch-tiled, double-buffered
            resident((S, H)),
            resident((1, H)),
            resident((H, H)),
            resident((1, H)),
            resident((H, AP)),
            resident((1, AP)),
        ],
        out_specs=pl.BlockSpec((tb, AP), lambda i: (i, 0)),
        compiler_params=pltpu.CompilerParams(
            dimension_semantics=("parallel",),         # batch tiles shard across v7x's 2 TCs
        ),
    )(x, prepped["w1"], prepped["b1"], prepped["w2"], prepped["b2"],
      prepped["w3"], prepped["b3"])

    mean = mean_p[:B, :A].astype(jnp.float32)
    # std is state-independent and precomputed at prep time; scale_tril = diag(std).
    return mean, prepped["std"], prepped["scale_tril"]


if __name__ == "__main__":
    key = jax.random.PRNGKey(0)
    k_params, k_state = jax.random.split(key)

    batch, state_dim, action_dim = 8, 16, 8
    params = init_params(k_params, state_dim, action_dim)
    prepped = prepare_params(params)
    state = jax.random.normal(k_state, (batch, state_dim), jnp.float32)

    mean, std, scale_tril = jax.block_until_ready(gaussian_bc_forward(state, prepped))

    # pure-JAX reference mirroring the kernel's bf16 weight storage / f32 accumulation
    w1, b1, w2, b2, w3, b3, log_std = params
    xr = state.astype(jnp.bfloat16).astype(jnp.float32)
    h = jnp.maximum(xr @ w1.astype(jnp.bfloat16).astype(jnp.float32) + b1, 0.0)
    h = h.astype(jnp.bfloat16).astype(jnp.float32)
    h = jnp.maximum(h @ w2.astype(jnp.bfloat16).astype(jnp.float32) + b2, 0.0)
    h = h.astype(jnp.bfloat16).astype(jnp.float32)
    mean_ref = jnp.tanh(h @ w3.astype(jnp.bfloat16).astype(jnp.float32) + b3)
    std_ref = jnp.exp(jnp.clip(log_std, LOGSTD_MIN, LOGSTD_MAX))

    assert mean.shape == (batch, action_dim)
    assert std.shape == (action_dim,)
    assert scale_tril.shape == (action_dim, action_dim)
    assert jnp.allclose(mean, mean_ref, atol=2e-2, rtol=2e-2), "mean mismatch"
    assert jnp.allclose(std, std_ref, atol=1e-6), "std mismatch"
    assert jnp.allclose(scale_tril, jnp.diag(std_ref), atol=1e-6), "scale_tril mismatch"

    print("KERNEL_OK")
</pallas_src>

<mosaic_0001>
module attributes {stable_mosaic.version = 11 : i64} {
  func.func @gaussian_bc_kernel(%arg0: i32, %arg1: memref<8x16xf32, #tpu.memory_space<vmem>>, %arg2: memref<16x512xbf16, #tpu.memory_space<vmem>>, %arg3: memref<1x512xf32, #tpu.memory_space<vmem>>, %arg4: memref<512x512xbf16, #tpu.memory_space<vmem>>, %arg5: memref<1x512xf32, #tpu.memory_space<vmem>>, %arg6: memref<512x128xbf16, #tpu.memory_space<vmem>>, %arg7: memref<1x128xf32, #tpu.memory_space<vmem>>, %arg8: memref<8x128xbf16, #tpu.memory_space<vmem>>) attributes {dimension_semantics = [#tpu.dimension_semantics<parallel>], iteration_bounds = array<i64: 1>, scalar_prefetch = 0 : i64, scratch_operands = 0 : i64, tpu.core_type = #tpu.core_type<tc>, window_params = [{transform_indices = @transform_0, window_bounds = array<i64: 8, 16>}, {pipeline_mode = #tpu.pipeline_mode<synchronous>, transform_indices = @transform_1, window_bounds = array<i64: 16, 512>}, {pipeline_mode = #tpu.pipeline_mode<synchronous>, transform_indices = @transform_2, window_bounds = array<i64: 1, 512>}, {pipeline_mode = #tpu.pipeline_mode<synchronous>, transform_indices = @transform_3, window_bounds = array<i64: 512, 512>}, {pipeline_mode = #tpu.pipeline_mode<synchronous>, transform_indices = @transform_4, window_bounds = array<i64: 1, 512>}, {pipeline_mode = #tpu.pipeline_mode<synchronous>, transform_indices = @transform_5, window_bounds = array<i64: 512, 128>}, {pipeline_mode = #tpu.pipeline_mode<synchronous>, transform_indices = @transform_6, window_bounds = array<i64: 1, 128>}, {transform_indices = @transform_7, window_bounds = array<i64: 8, 128>}]} {
    %c0 = arith.constant 0 : index
    %c0_0 = arith.constant 0 : index
    %0 = vector.load %arg1[%c0, %c0_0] : memref<8x16xf32, #tpu.memory_space<vmem>>, vector<8x16xf32>
    %1 = arith.truncf %0 : vector<8x16xf32> to vector<8x16xbf16>
    %c0_1 = arith.constant 0 : index
    %c0_2 = arith.constant 0 : index
    %2 = vector.load %arg2[%c0_1, %c0_2] : memref<16x512xbf16, #tpu.memory_space<vmem>>, vector<16x512xbf16>
    %cst = arith.constant dense<0.000000e+00> : vector<8x512xf32>
    %3 = tpu.matmul %1, %2, %cst {dimension_numbers = #tpu.dot_dimension_numbers<[1], [0], [0], [1], [0, 0, 1, 1], [], []>} : vector<8x16xbf16>, vector<16x512xbf16>, vector<8x512xf32> -> vector<8x512xf32>
    %c0_3 = arith.constant 0 : index
    %c0_4 = arith.constant 0 : index
    %4 = vector.load %arg3[%c0_3, %c0_4] : memref<1x512xf32, #tpu.memory_space<vmem>>, vector<1x512xf32>
    %5 = vector.broadcast %4 : vector<1x512xf32> to vector<8x512xf32>
    %6 = arith.addf %3, %5 : vector<8x512xf32>
    %cst_5 = arith.constant 0.000000e+00 : f32
    %7 = vector.broadcast %cst_5 : f32 to vector<8x512xf32>
    %8 = arith.maximumf %6, %7 : vector<8x512xf32>
    %9 = arith.truncf %8 : vector<8x512xf32> to vector<8x512xbf16>
    %c0_6 = arith.constant 0 : index
    %c0_7 = arith.constant 0 : index
    %10 = vector.load %arg4[%c0_6, %c0_7] : memref<512x512xbf16, #tpu.memory_space<vmem>>, vector<512x512xbf16>
    %cst_8 = arith.constant dense<0.000000e+00> : vector<8x512xf32>
    %11 = tpu.matmul %9, %10, %cst_8 {dimension_numbers = #tpu.dot_dimension_numbers<[1], [0], [0], [1], [0, 0, 1, 1], [], []>} : vector<8x512xbf16>, vector<512x512xbf16>, vector<8x512xf32> -> vector<8x512xf32>
    %c0_9 = arith.constant 0 : index
    %c0_10 = arith.constant 0 : index
    %12 = vector.load %arg5[%c0_9, %c0_10] : memref<1x512xf32, #tpu.memory_space<vmem>>, vector<1x512xf32>
    %13 = vector.broadcast %12 : vector<1x512xf32> to vector<8x512xf32>
    %14 = arith.addf %11, %13 : vector<8x512xf32>
    %cst_11 = arith.constant 0.000000e+00 : f32
    %15 = vector.broadcast %cst_11 : f32 to vector<8x512xf32>
    %16 = arith.maximumf %14, %15 : vector<8x512xf32>
    %17 = arith.truncf %16 : vector<8x512xf32> to vector<8x512xbf16>
    %c0_12 = arith.constant 0 : index
    %c0_13 = arith.constant 0 : index
    %18 = vector.load %arg6[%c0_12, %c0_13] : memref<512x128xbf16, #tpu.memory_space<vmem>>, vector<512x128xbf16>
    %cst_14 = arith.constant dense<0.000000e+00> : vector<8x128xf32>
    %19 = tpu.matmul %17, %18, %cst_14 {dimension_numbers = #tpu.dot_dimension_numbers<[1], [0], [0], [1], [0, 0, 1, 1], [], []>} : vector<8x512xbf16>, vector<512x128xbf16>, vector<8x128xf32> -> vector<8x128xf32>
    %c0_15 = arith.constant 0 : index
    %c0_16 = arith.constant 0 : index
    %20 = vector.load %arg7[%c0_15, %c0_16] : memref<1x128xf32, #tpu.memory_space<vmem>>, vector<1x128xf32>
    %21 = vector.broadcast %20 : vector<1x128xf32> to vector<8x128xf32>
    %22 = arith.addf %19, %21 : vector<8x128xf32>
    %23 = math.tanh %22 : vector<8x128xf32>
    %24 = arith.truncf %23 : vector<8x128xf32> to vector<8x128xbf16>
    %c0_17 = arith.constant 0 : index
    %c0_18 = arith.constant 0 : index
    %25 = vector.load %arg8[%c0_17, %c0_18] : memref<8x128xbf16, #tpu.memory_space<vmem>>, vector<8x128xbf16>
    tpu.vector_store %arg8[%c0_17, %c0_18], %24 {strides = array<i32>} : memref<8x128xbf16, #tpu.memory_space<vmem>>, vector<8x128xbf16>,
    return
  }
  func.func @transform_0(%arg0: i32) -> (i32, i32) {
    %c0_i32 = arith.constant 0 : i32
    %c0_i32_0 = arith.constant 0 : i32
    return %arg0, %c0_i32 : i32, i32
  }
  func.func @transform_1(%arg0: i32) -> (i32, i32) {
    %c0_i32 = arith.constant 0 : i32
    %c0_i32_0 = arith.constant 0 : i32
    %c0_i32_1 = arith.constant 0 : i32
    return %c0_i32, %c0_i32_0 : i32, i32
  }
  func.func @transform_2(%arg0: i32) -> (i32, i32) {
    %c0_i32 = arith.constant 0 : i32
    %c0_i32_0 = arith.constant 0 : i32
    %c0_i32_1 = arith.constant 0 : i32
    return %c0_i32, %c0_i32_0 : i32, i32
  }
  func.func @transform_3(%arg0: i32) -> (i32, i32) {
    %c0_i32 = arith.constant 0 : i32
    %c0_i32_0 = arith.constant 0 : i32
    %c0_i32_1 = arith.constant 0 : i32
    return %c0_i32, %c0_i32_0 : i32, i32
  }
  func.func @transform_4(%arg0: i32) -> (i32, i32) {
    %c0_i32 = arith.constant 0 : i32
    %c0_i32_0 = arith.constant 0 : i32
    %c0_i32_1 = arith.constant 0 : i32
    return %c0_i32, %c0_i32_0 : i32, i32
  }
  func.func @transform_5(%arg0: i32) -> (i32, i32) {
    %c0_i32 = arith.constant 0 : i32
    %c0_i32_0 = arith.constant 0 : i32
    %c0_i32_1 = arith.constant 0 : i32
    return %c0_i32, %c0_i32_0 : i32, i32
  }
  func.func @transform_6(%arg0: i32) -> (i32, i32) {
    %c0_i32 = arith.constant 0 : i32
    %c0_i32_0 = arith.constant 0 : i32
    %c0_i32_1 = arith.constant 0 : i32
    return %c0_i32, %c0_i32_0 : i32, i32
  }
  func.func @transform_7(%arg0: i32) -> (i32, i32) {
    %c0_i32 = arith.constant 0 : i32
    %c0_i32_0 = arith.constant 0 : i32
    return %arg0, %c0_i32 : i32, i32
  }
}

</mosaic_0001>

<llo_original>
// kernel: tpu_custom_call.1
$region0: #{tpu_custom_call.1}
  #allocation0 [shape = 'u32[]', space=smem, size = 0x4, offset = 0x4, fixed_abs, tag = 'smem constant byte address 0x4 - core index']
  #allocation1 [shape = 'u32[72,128]{1,0:T(1,128)}', space=vmem, size = 0x9000, scoped, tag = 'internal scratch']
  %s0 = inlined_call_operand.hbm [shape: f32[8,16], index: 0, kind: input, shape index: {}]
  %s1 = inlined_call_operand.hbm [shape: bf16[16,512], index: 1, kind: input, shape index: {}]
  %s2 = inlined_call_operand.hbm [shape: f32[1,512], index: 2, kind: input, shape index: {}]
  %s3 = inlined_call_operand.hbm [shape: bf16[512,512], index: 3, kind: input, shape index: {}]
  %s4 = inlined_call_operand.hbm [shape: f32[1,512], index: 4, kind: input, shape index: {}]
  %s5 = inlined_call_operand.hbm [shape: bf16[512,128], index: 5, kind: input, shape index: {}]
  %s6 = inlined_call_operand.vmem [shape: f32[1,128], index: 6, kind: input, shape index: {}]
  %s7 = inlined_call_operand.hbm [shape: bf16[8,128], index: 7, kind: output, shape index: {}]
  %s8 = sld [smem:[#allocation0]]
  $region62: #{tpu_custom_call.1} parent=0
    _
  %s10 = ssub.s32 1, %s8
  %s11 = scalar_select 0, %s10, %s8
  $region1: #{tpu_custom_call.1} parent=0
    #allocation2 [shape = 'u8[4096]{0}', space=vmem, size = 0x1000, scoped, tag = 'input window, operand 0, single buffered']
    #allocation3 [shape = 's32[1]{0}', space=sflag, size = 0x4, scoped, tag = 'scoped memory for tpu_custom_call.1']
    #allocation4 [shape = 's32[1]{0}', space=sflag, size = 0x4, scoped, tag = 'scoped memory for tpu_custom_call.1']
    #allocation5 [shape = 'u8[16384]{0}', space=vmem, size = 0x4000, scoped, tag = 'input window, operand 1, single buffered']
    #allocation6 [shape = 's32[1]{0}', space=sflag, size = 0x4, scoped, tag = 'scoped memory for tpu_custom_call.1']
    #allocation7 [shape = 'u8[2048]{0}', space=vmem, size = 0x800, scoped, tag = 'input window, operand 2, single buffered']
    #allocation8 [shape = 'u8[524288]{0}', space=vmem, size = 0x80000, scoped, tag = 'input window, operand 3, single buffered']
    #allocation9 [shape = 's32[1]{0}', space=sflag, size = 0x4, scoped, tag = 'scoped memory for tpu_custom_call.1']
    #allocation10 [shape = 'u8[2048]{0}', space=vmem, size = 0x800, scoped, tag = 'input window, operand 4, single buffered']
    #allocation11 [shape = 'u8[131072]{0}', space=vmem, size = 0x20000, scoped, tag = 'input window, operand 5, single buffered']
    #allocation12 [shape = 's32[1]{0}', space=sflag, size = 0x4, scoped, tag = 'scoped memory for tpu_custom_call.1']
    #allocation13 [shape = 'u8[2048]{0}', space=vmem, size = 0x800, scoped, tag = 'output window, operand 0, single buffered']
    %12 = vsyncpa [#allocation3], 0
    %13 = vsyncpa [#allocation6], 0
    %14 = vsyncpa [#allocation9], 0
    %15 = vsyncpa [#allocation12], 0
    %16 = vsyncpa [#allocation4], 0
    // Predicated region
    $region2: #{tpu_custom_call.1} parent=1 // pred_check
      _
    $region3: #{tpu_custom_call.1} parent=1 // pred_check_branch
      %18 = sbr.rel (0) target = $region5
    $region4: #{tpu_custom_call.1} parent=1 // pred_region
      %20 = vsyncadd [#allocation3], 0
      %s22 = sshll.u32 %s0, 4
      %s23 = int_to_ptr.hbm [resolvable:$true] %s22
      %s24 = sshll.u32 [#allocation2], 4
      %s25 = int_to_ptr.vmem [resolvable:$true] %s24
      %27 = dma.hbm_to_vmem [thread:$0]  %s23, 128, %s25, [#allocation3]
    $region5: #{tpu_custom_call.1} parent=1 // pred_fallthru
      _
    // Predicated region
    $region6: #{tpu_custom_call.1} parent=1 // pred_check
      _
    $region7: #{tpu_custom_call.1} parent=1 // pred_check_branch
      %29 = sbr.rel (0) target = $region9
    $region8: #{tpu_custom_call.1} parent=1 // pred_region
      %31 = vsyncadd [#allocation6], 0
      %s32 = sshll.u32 %s1, 4
      %s33 = int_to_ptr.hbm [resolvable:$true] %s32
      %s34 = sshll.u32 [#allocation5], 4
      %s35 = int_to_ptr.vmem [resolvable:$true] %s34
      %40 = dma.hbm_to_vmem [thread:$0]  %s33, 512, %s35, [#allocation6], 256, 256, 16
    $region9: #{tpu_custom_call.1} parent=1 // pred_fallthru
      _
    // Predicated region
    $region10: #{tpu_custom_call.1} parent=1 // pred_check
      _
    $region11: #{tpu_custom_call.1} parent=1 // pred_check_branch
      %42 = sbr.rel (0) target = $region13
    $region12: #{tpu_custom_call.1} parent=1 // pred_region
      %44 = vsyncadd [#allocation6], 0
      %s46 = sshll.u32 %s2, 4
      %s47 = int_to_ptr.hbm [resolvable:$true] %s46
      %s48 = sshll.u32 [#allocation7], 4
      %s49 = int_to_ptr.vmem [resolvable:$true] %s48
      %51 = dma.hbm_to_vmem [thread:$0]  %s47, 64, %s49, [#allocation6]
    $region13: #{tpu_custom_call.1} parent=1 // pred_fallthru
      _
    // Predicated region
    $region14: #{tpu_custom_call.1} parent=1 // pred_check
      _
    $region15: #{tpu_custom_call.1} parent=1 // pred_check_branch
      %53 = sbr.rel (0) target = $region17
    $region16: #{tpu_custom_call.1} parent=1 // pred_region
      %55 = vsyncadd [#allocation9], 0
      %s56 = sshll.u32 %s3, 4
      %s57 = int_to_ptr.hbm [resolvable:$true] %s56
      %s58 = sshll.u32 [#allocation8], 4
      %s59 = int_to_ptr.vmem [resolvable:$true] %s58
      %64 = dma.hbm_to_vmem [thread:$0]  %s57, 16384, %s59, [#allocation9], 256, 256, 16
    $region17: #{tpu_custom_call.1} parent=1 // pred_fallthru
      _
    // Predicated region
    $region18: #{tpu_custom_call.1} parent=1 // pred_check
      _
    $region19: #{tpu_custom_call.1} parent=1 // pred_check_branch
      %66 = sbr.rel (0) target = $region21
    $region20: #{tpu_custom_call.1} parent=1 // pred_region
      %68 = vsyncadd [#allocation9], 0
      %s70 = sshll.u32 %s4, 4
      %s71 = int_to_ptr.hbm [resolvable:$true] %s70
      %s72 = sshll.u32 [#allocation10], 4
      %s73 = int_to_ptr.vmem [resolvable:$true] %s72
      %75 = dma.hbm_to_vmem [thread:$0]  %s71, 64, %s73, [#allocation9]
    $region21: #{tpu_custom_call.1} parent=1 // pred_fallthru
      _
    // Predicated region
    $region22: #{tpu_custom_call.1} parent=1 // pred_check
      _
    $region23: #{tpu_custom_call.1} parent=1 // pred_check_branch
      %77 = sbr.rel (0) target = $region25
    $region24: #{tpu_custom_call.1} parent=1 // pred_region
      %79 = vsyncadd [#allocation12], 0
      %s80 = sshll.u32 %s5, 4
      %s81 = int_to_ptr.hbm [resolvable:$true] %s80
      %s82 = sshll.u32 [#allocation11], 4
      %s83 = int_to_ptr.vmem [resolvable:$true] %s82
      %88 = dma.hbm_to_vmem [thread:$0]  %s81, 4096, %s83, [#allocation12], 64, 64, 4
    $region25: #{tpu_custom_call.1} parent=1 // pred_fallthru
      _
    // Predicated region
    $region26: #{tpu_custom_call.1} parent=1 // pred_check
      _
    $region27: #{tpu_custom_call.1} parent=1 // pred_check_branch
      %90 = sbr.rel (0) target = $region29
    $region28: #{tpu_custom_call.1} parent=1 // pred_region
      _
    $region29: #{tpu_custom_call.1} parent=1 // pred_fallthru
      _
    // Predicated region
    $region30: #{tpu_custom_call.1} parent=1 // pred_check
      _
    $region31: #{tpu_custom_call.1} parent=1 // pred_check_branch
      %92 = sbr.rel (0) target = $region33
    $region32: #{tpu_custom_call.1} parent=1 // pred_region
      %94 = dma.done [#allocation3], 128
    $region33: #{tpu_custom_call.1} parent=1 // pred_fallthru
      _
    // Predicated region
    $region34: #{tpu_custom_call.1} parent=1 // pred_check
      _
    $region35: #{tpu_custom_call.1} parent=1 // pred_check_branch
      %96 = sbr.rel (0) target = $region37
    $region36: #{tpu_custom_call.1} parent=1 // pred_region
      %98 = dma.done [#allocation6], 512
    $region37: #{tpu_custom_call.1} parent=1 // pred_fallthru
      _
    // Predicated region
    $region38: #{tpu_custom_call.1} parent=1 // pred_check
      _
    $region39: #{tpu_custom_call.1} parent=1 // pred_check_branch
      %100 = sbr.rel (0) target = $region41
    $region40: #{tpu_custom_call.1} parent=1 // pred_region
      %102 = dma.done [#allocation6], 64
    $region41: #{tpu_custom_call.1} parent=1 // pred_fallthru
      _
    // Predicated region
    $region42: #{tpu_custom_call.1} parent=1 // pred_check
      _
    $region43: #{tpu_custom_call.1} parent=1 // pred_check_branch
      %104 = sbr.rel (0) target = $region45
    $region44: #{tpu_custom_call.1} parent=1 // pred_region
      %106 = dma.done [#allocation9], 16384
    $region45: #{tpu_custom_call.1} parent=1 // pred_fallthru
      _
    // Predicated region
    $region46: #{tpu_custom_call.1} parent=1 // pred_check
      _
    $region47: #{tpu_custom_call.1} parent=1 // pred_check_branch
      %108 = sbr.rel (0) target = $region49
    $region48: #{tpu_custom_call.1} parent=1 // pred_region
      %110 = dma.done [#allocation9], 64
    $region49: #{tpu_custom_call.1} parent=1 // pred_fallthru
      _
    // Predicated region
    $region50: #{tpu_custom_call.1} parent=1 // pred_check
      _
    $region51: #{tpu_custom_call.1} parent=1 // pred_check_branch
      %112 = sbr.rel (0) target = $region53
    $region52: #{tpu_custom_call.1} parent=1 // pred_region
      %114 = dma.done [#allocation12], 4096
    $region53: #{tpu_custom_call.1} parent=1 // pred_fallthru
      _
    %v116 = vld [vmem:[#allocation2] sm:$0xff]
    %v117 = vpack.c.bf16 %v116, %v116
    %v118 = vld [vmem:[#allocation5] sm:$0xff]
    %v119 = vld [vmem:[#allocation5 + $0x8] sm:$0xff]
    %v120 = vld [vmem:[#allocation5 + $0x10] sm:$0xff]
    %v121 = vld [vmem:[#allocation5 + $0x18] sm:$0xff]
    %v122 = vld [vmem:[#allocation7] sm:$0xf]
    %v124 = vperm.slane %v122, 0
    %v125 = vperm.slane %v122, 1
    %v126 = vperm.slane %v122, 2
    %v127 = vperm.slane %v122, 3
    %v136 = vunpack.c.l.b16 %v118
    %v137 = vunpack.c.h.b16 %v118
    %v138 = vunpack.c.l.b16 %v119
    %v139 = vunpack.c.h.b16 %v119
    %v140 = vunpack.c.l.b16 %v120
    %v141 = vunpack.c.h.b16 %v120
    %v142 = vunpack.c.l.b16 %v121
    %v143 = vunpack.c.h.b16 %v121
    %v144 = vpack.c.b16 %v140, %v136
    %v145 = vpack.c.b16 %v141, %v137
    %v146 = vpack.c.b16 %v142, %v138
    %v147 = vpack.c.b16 %v143, %v139
    %vm152 = vcmask 130048
    %v154 = vsel %vm152, %v117, 0
    %156 = vmatpush.bf16.msra.mxu0 0
    %157 = vmatpush.bf16.msra.mxu0 0
    %158 = vmatpush.bf16.msra.mxu0 0
    %159 = vmatpush.bf16.msra.mxu0 0
    %160 = vmatpush.bf16.msra.mxu0 0
    %161 = vmatpush.bf16.msra.mxu0 0
    %162 = vmatpush.bf16.msra.mxu0 0
    %163 = vmatpush.bf16.msra.mxu0 %v144
    %164 = vmatmul.bf16.gmra.mxu0 %v154
    %v165 = vpop.f32.mrf.mxu0
    %v166 = vadd.f32 %v124, %v165
    %v167 = vpop.f32.mrf.mxu0
    %168 = vdwg.mxu0
    %169 = vmatpush.bf16.msra.mxu0 0
    %170 = vmatpush.bf16.msra.mxu0 0
    %171 = vmatpush.bf16.msra.mxu0 0
    %172 = vmatpush.bf16.msra.mxu0 0
    %173 = vmatpush.bf16.msra.mxu0 0
    %174 = vmatpush.bf16.msra.mxu0 0
    %175 = vmatpush.bf16.msra.mxu0 0
    %176 = vmatpush.bf16.msra.mxu0 %v145
    %177 = vmatmul.bf16.gmra.mxu0 %v154
    %v178 = vpop.f32.mrf.mxu0
    %v179 = vadd.f32 %v125, %v178
    %v180 = vpop.f32.mrf.mxu0
    %181 = vdwg.mxu0
    %182 = vmatpush.bf16.msra.mxu0 0
    %183 = vmatpush.bf16.msra.mxu0 0
    %184 = vmatpush.bf16.msra.mxu0 0
    %185 = vmatpush.bf16.msra.mxu0 0
    %186 = vmatpush.bf16.msra.mxu0 0
    %187 = vmatpush.bf16.msra.mxu0 0
    %188 = vmatpush.bf16.msra.mxu0 0
    %189 = vmatpush.bf16.msra.mxu0 %v146
    %190 = vmatmul.bf16.gmra.mxu0 %v154
    %v191 = vpop.f32.mrf.mxu0
    %v192 = vadd.f32 %v126, %v191
    %v193 = vpop.f32.mrf.mxu0
    %194 = vdwg.mxu0
    %195 = vmatpush.bf16.msra.mxu0 0
    %196 = vmatpush.bf16.msra.mxu0 0
    %197 = vmatpush.bf16.msra.mxu0 0
    %198 = vmatpush.bf16.msra.mxu0 0
    %199 = vmatpush.bf16.msra.mxu0 0
    %200 = vmatpush.bf16.msra.mxu0 0
    %201 = vmatpush.bf16.msra.mxu0 0
    %202 = vmatpush.bf16.msra.mxu0 %v147
    %203 = vmatmul.bf16.gmra.mxu0 %v154
    %v204 = vpop.f32.mrf.mxu0
    %v205 = vadd.f32 %v127, %v204
    %v206 = vpop.f32.mrf.mxu0
    %207 = vdwg.mxu0
    %v208 = vmax.f32 %v166, 0.0
    %v209 = vmax.f32 %v179, 0.0
    %v210 = vmax.f32 %v192, 0.0
    %v211 = vmax.f32 %v205, 0.0
    %v212 = vpack.c.bf16 %v208, %v208
    %v213 = vpack.c.bf16 %v209, %v209
    %v214 = vpack.c.bf16 %v210, %v210
    %v215 = vpack.c.bf16 %v211, %v211
    %v216 = vld [vmem:[#allocation8] sm:$0xff]
    %v217 = vld [vmem:[#allocation8 + $0x8] sm:$0xff]
    %v218 = vld [vmem:[#allocation8 + $0x10] sm:$0xff]
    %v219 = vld [vmem:[#allocation8 + $0x18] sm:$0xff]
    %v220 = vld [vmem:[#allocation8 + $0x20] sm:$0xff]
    %v221 = vld [vmem:[#allocation8 + $0x28] sm:$0xff]
    %v222 = vld [vmem:[#allocation8 + $0x30] sm:$0xff]
    %v223 = vld [vmem:[#allocation8 + $0x38] sm:$0xff]
    %v224 = vld [vmem:[#allocation8 + $0x40] sm:$0xff]
    %v225 = vld [vmem:[#allocation8 + $0x48] sm:$0xff]
    %v226 = vld [vmem:[#allocation8 + $0x50] sm:$0xff]
    %v227 = vld [vmem:[#allocation8 + $0x58] sm:$0xff]
    %v228 = vld [vmem:[#allocation8 + $0x60] sm:$0xff]
    %v229 = vld [vmem:[#allocation8 + $0x68] sm:$0xff]
    %v230 = vld [vmem:[#allocation8 + $0x70] sm:$0xff]
    %v231 = vld [vmem:[#allocation8 + $0x78] sm:$0xff]
    %v232 = vld [vmem:[#allocation8 + $0x80] sm:$0xff]
    %v233 = vld [vmem:[#allocation8 + $0x88] sm:$0xff]
    %v234 = vld [vmem:[#allocation8 + $0x90] sm:$0xff]
    %v235 = vld [vmem:[#allocation8 + $0x98] sm:$0xff]
    %v236 = vld [vmem:[#allocation8 + $0xa0] sm:$0xff]
    %v237 = vld [vmem:[#allocation8 + $0xa8] sm:$0xff]
    %v238 = vld [vmem:[#allocation8 + $0xb0] sm:$0xff]
    %v239 = vld [vmem:[#allocation8 + $0xb8] sm:$0xff]
    %v240 = vld [vmem:[#allocation8 + $0xc0] sm:$0xff]
    %v241 = vld [vmem:[#allocation8 + $0xc8] sm:$0xff]
    %v242 = vld [vmem:[#allocation8 + $0xd0] sm:$0xff]
    %v243 = vld [vmem:[#allocation8 + $0xd8] sm:$0xff]
    %v244 = vld [vmem:[#allocation8 + $0xe0] sm:$0xff]
    %v245 = vld [vmem:[#allocation8 + $0xe8] sm:$0xff]
    %v246 = vld [vmem:[#allocation8 + $0xf0] sm:$0xff]
    %v247 = vld [vmem:[#allocation8 + $0xf8] sm:$0xff]
    %v248 = vld [vmem:[#allocation8 + $0x100] sm:$0xff]
    %v249 = vld [vmem:[#allocation8 + $0x108] sm:$0xff]
    %v250 = vld [vmem:[#allocation8 + $0x110] sm:$0xff]
    %v251 = vld [vmem:[#allocation8 + $0x118] sm:$0xff]
    %v252 = vld [vmem:[#allocation8 + $0x120] sm:$0xff]
    %v253 = vld [vmem:[#allocation8 + $0x128] sm:$0xff]
    %v254 = vld [vmem:[#allocation8 + $0x130] sm:$0xff]
    %v255 = vld [vmem:[#allocation8 + $0x138] sm:$0xff]
    %v256 = vld [vmem:[#allocation8 + $0x140] sm:$0xff]
    %v257 = vld [vmem:[#allocation8 + $0x148] sm:$0xff]
    %v258 = vld [vmem:[#allocation8 + $0x150] sm:$0xff]
    %v259 = vld [vmem:[#allocation8 + $0x158] sm:$0xff]
    %v260 = vld [vmem:[#allocation8 + $0x160] sm:$0xff]
    %v261 = vld [vmem:[#allocation8 + $0x168] sm:$0xff]
    %v262 = vld [vmem:[#allocation8 + $0x170] sm:$0xff]
    %v263 = vld [vmem:[#allocation8 + $0x178] sm:$0xff]
    %v264 = vld [vmem:[#allocation8 + $0x180] sm:$0xff]
    %v265 = vld [vmem:[#allocation8 + $0x188] sm:$0xff]
    %v266 = vld [vmem:[#allocation8 + $0x190] sm:$0xff]
    %v267 = vld [vmem:[#allocation8 + $0x198] sm:$0xff]
    %v268 = vld [vmem:[#allocation8 + $0x1a0] sm:$0xff]
    %v269 = vld [vmem:[#allocation8 + $0x1a8] sm:$0xff]
    %v270 = vld [vmem:[#allocation8 + $0x1b0] sm:$0xff]
    %v271 = vld [vmem:[#allocation8 + $0x1b8] sm:$0xff]
    %v272 = vld [vmem:[#allocation8 + $0x1c0] sm:$0xff]
    %v273 = vld [vmem:[#allocation8 + $0x1c8] sm:$0xff]
    %v274 = vld [vmem:[#allocation8 + $0x1d0] sm:$0xff]
    %v275 = vld [vmem:[#allocation8 + $0x1d8] sm:$0xff]
    %v276 = vld [vmem:[#allocation8 + $0x1e0] sm:$0xff]
    %v277 = vld [vmem:[#allocation8 + $0x1e8] sm:$0xff]
    %v278 = vld [vmem:[#allocation8 + $0x1f0] sm:$0xff]
    %v279 = vld [vmem:[#allocation8 + $0x1f8] sm:$0xff]
    %v280 = vld [vmem:[#allocation8 + $0x200] sm:$0xff]
    %v281 = vld [vmem:[#allocation8 + $0x208] sm:$0xff]
    %v282 = vld [vmem:[#allocation8 + $0x210] sm:$0xff]
    %v283 = vld [vmem:[#allocation8 + $0x218] sm:$0xff]
    %v284 = vld [vmem:[#allocation8 + $0x220] sm:$0xff]
    %v285 = vld [vmem:[#allocation8 + $0x228] sm:$0xff]
    %v286 = vld [vmem:[#allocation8 + $0x230] sm:$0xff]
    %v287 = vld [vmem:[#allocation8 + $0x238] sm:$0xff]
    %v288 = vld [vmem:[#allocation8 + $0x240] sm:$0xff]
    %v289 = vld [vmem:[#allocation8 + $0x248] sm:$0xff]
    %v290 = vld [vmem:[#allocation8 + $0x250] sm:$0xff]
    %v291 = vld [vmem:[#allocation8 + $0x258] sm:$0xff]
    %v292 = vld [vmem:[#allocation8 + $0x260] sm:$0xff]
    %v293 = vld [vmem:[#allocation8 + $0x268] sm:$0xff]
    %v294 = vld [vmem:[#allocation8 + $0x270] sm:$0xff]
    %v295 = vld [vmem:[#allocation8 + $0x278] sm:$0xff]
    %v296 = vld [vmem:[#allocation8 + $0x280] sm:$0xff]
    %v297 = vld [vmem:[#allocation8 + $0x288] sm:$0xff]
    %v298 = vld [vmem:[#allocation8 + $0x290] sm:$0xff]
    %v299 = vld [vmem:[#allocation8 + $0x298] sm:$0xff]
    %v300 = vld [vmem:[#allocation8 + $0x2a0] sm:$0xff]
    %v301 = vld [vmem:[#allocation8 + $0x2a8] sm:$0xff]
    %v302 = vld [vmem:[#allocation8 + $0x2b0] sm:$0xff]
    %v303 = vld [vmem:[#allocation8 + $0x2b8] sm:$0xff]
    %v304 = vld [vmem:[#allocation8 + $0x2c0] sm:$0xff]
    %v305 = vld [vmem:[#allocation8 + $0x2c8] sm:$0xff]
    %v306 = vld [vmem:[#allocation8 + $0x2d0] sm:$0xff]
    %v307 = vld [vmem:[#allocation8 + $0x2d8] sm:$0xff]
    %v308 = vld [vmem:[#allocation8 + $0x2e0] sm:$0xff]
    %v309 = vld [vmem:[#allocation8 + $0x2e8] sm:$0xff]
    %v310 = vld [vmem:[#allocation8 + $0x2f0] sm:$0xff]
    %v311 = vld [vmem:[#allocation8 + $0x2f8] sm:$0xff]
    %v312 = vld [vmem:[#allocation8 + $0x300] sm:$0xff]
    %v313 = vld [vmem:[#allocation8 + $0x308] sm:$0xff]
    %v314 = vld [vmem:[#allocation8 + $0x310] sm:$0xff]
    %v315 = vld [vmem:[#allocation8 + $0x318] sm:$0xff]
    %v316 = vld [vmem:[#allocation8 + $0x320] sm:$0xff]
    %v317 = vld [vmem:[#allocation8 + $0x328] sm:$0xff]
    %v318 = vld [vmem:[#allocation8 + $0x330] sm:$0xff]
    %v319 = vld [vmem:[#allocation8 + $0x338] sm:$0xff]
    %v320 = vld [vmem:[#allocation8 + $0x340] sm:$0xff]
    %v321 = vld [vmem:[#allocation8 + $0x348] sm:$0xff]
    %v322 = vld [vmem:[#allocation8 + $0x350] sm:$0xff]
    %v323 = vld [vmem:[#allocation8 + $0x358] sm:$0xff]
    %v324 = vld [vmem:[#allocation8 + $0x360] sm:$0xff]
    %v325 = vld [vmem:[#allocation8 + $0x368] sm:$0xff]
    %v326 = vld [vmem:[#allocation8 + $0x370] sm:$0xff]
    %v327 = vld [vmem:[#allocation8 + $0x378] sm:$0xff]
    %v328 = vld [vmem:[#allocation8 + $0x380] sm:$0xff]
    %v329 = vld [vmem:[#allocation8 + $0x388] sm:$0xff]
    %v330 = vld [vmem:[#allocation8 + $0x390] sm:$0xff]
    %v331 = vld [vmem:[#allocation8 + $0x398] sm:$0xff]
    %v332 = vld [vmem:[#allocation8 + $0x3a0] sm:$0xff]
    %v333 = vld [vmem:[#allocation8 + $0x3a8] sm:$0xff]
    %v334 = vld [vmem:[#allocation8 + $0x3b0] sm:$0xff]
    %v335 = vld [vmem:[#allocation8 + $0x3b8] sm:$0xff]
    %v336 = vld [vmem:[#allocation8 + $0x3c0] sm:$0xff]
    %v337 = vld [vmem:[#allocation8 + $0x3c8] sm:$0xff]
    %v338 = vld [vmem:[#allocation8 + $0x3d0] sm:$0xff]
    %v339 = vld [vmem:[#allocation8 + $0x3d8] sm:$0xff]
    %v340 = vld [vmem:[#allocation8 + $0x3e0] sm:$0xff]
    %v341 = vld [vmem:[#allocation8 + $0x3e8] sm:$0xff]
    %v342 = vld [vmem:[#allocation8 + $0x3f0] sm:$0xff]
    %v343 = vld [vmem:[#allocation8 + $0x3f8] sm:$0xff]
    %v344 = vld [vmem:[#allocation10] sm:$0xf]
    %v346 = vperm.slane %v344, 0
    %v347 = vperm.slane %v344, 1
    %v348 = vperm.slane %v344, 2
    %v349 = vperm.slane %v344, 3
    %v482 = vunpack.c.l.b16 %v216
    %v483 = vunpack.c.h.b16 %v216
    %v484 = vunpack.c.l.b16 %v217
    %v485 = vunpack.c.h.b16 %v217
    %v486 = vunpack.c.l.b16 %v218
    %v487 = vunpack.c.h.b16 %v218
    %v488 = vunpack.c.l.b16 %v219
    %v489 = vunpack.c.h.b16 %v219
    %v490 = vunpack.c.l.b16 %v220
    %v491 = vunpack.c.h.b16 %v220
    %v492 = vunpack.c.l.b16 %v221
    %v493 = vunpack.c.h.b16 %v221
    %v494 = vunpack.c.l.b16 %v222
    %v495 = vunpack.c.h.b16 %v222
    %v496 = vunpack.c.l.b16 %v223
    %v497 = vunpack.c.h.b16 %v223
    %v498 = vunpack.c.l.b16 %v224
    %v499 = vunpack.c.h.b16 %v224
    %v500 = vunpack.c.l.b16 %v225
    %v501 = vunpack.c.h.b16 %v225
    %v502 = vunpack.c.l.b16 %v226
    %v503 = vunpack.c.h.b16 %v226
    %v504 = vunpack.c.l.b16 %v227
    %v505 = vunpack.c.h.b16 %v227
    %v506 = vunpack.c.l.b16 %v228
    %v507 = vunpack.c.h.b16 %v228
    %v508 = vunpack.c.l.b16 %v229
    %v509 = vunpack.c.h.b16 %v229
    %v510 = vunpack.c.l.b16 %v230
    %v511 = vunpack.c.h.b16 %v230
    %v512 = vunpack.c.l.b16 %v231
    %v513 = vunpack.c.h.b16 %v231
    %v514 = vunpack.c.l.b16 %v232
    %v515 = vunpack.c.h.b16 %v232
    %v516 = vunpack.c.l.b16 %v233
    %v517 = vunpack.c.h.b16 %v233
    %v518 = vunpack.c.l.b16 %v234
    %v519 = vunpack.c.h.b16 %v234
    %v520 = vunpack.c.l.b16 %v235
    %v521 = vunpack.c.h.b16 %v235
    %v522 = vunpack.c.l.b16 %v236
    %v523 = vunpack.c.h.b16 %v236
    %v524 = vunpack.c.l.b16 %v237
    %v525 = vunpack.c.h.b16 %v237
    %v526 = vunpack.c.l.b16 %v238
    %v527 = vunpack.c.h.b16 %v238
    %v528 = vunpack.c.l.b16 %v239
    %v529 = vunpack.c.h.b16 %v239
    %v530 = vunpack.c.l.b16 %v240
    %v531 = vunpack.c.h.b16 %v240
    %v532 = vunpack.c.l.b16 %v241
    %v533 = vunpack.c.h.b16 %v241
    %v534 = vunpack.c.l.b16 %v242
    %v535 = vunpack.c.h.b16 %v242
    %v536 = vunpack.c.l.b16 %v243
    %v537 = vunpack.c.h.b16 %v243
    %v538 = vunpack.c.l.b16 %v244
    %v539 = vunpack.c.h.b16 %v244
    %v540 = vunpack.c.l.b16 %v245
    %v541 = vunpack.c.h.b16 %v245
    %v542 = vunpack.c.l.b16 %v246
    %v543 = vunpack.c.h.b16 %v246
    %v544 = vunpack.c.l.b16 %v247
    %v545 = vunpack.c.h.b16 %v247
    %v546 = vunpack.c.l.b16 %v248
    %v547 = vunpack.c.h.b16 %v248
    %v548 = vunpack.c.l.b16 %v249
    %v549 = vunpack.c.h.b16 %v249
    %v550 = vunpack.c.l.b16 %v250
    %v551 = vunpack.c.h.b16 %v250
    %v552 = vunpack.c.l.b16 %v251
    %v553 = vunpack.c.h.b16 %v251
    %v554 = vunpack.c.l.b16 %v252
    %v555 = vunpack.c.h.b16 %v252
    %v556 = vunpack.c.l.b16 %v253
    %v557 = vunpack.c.h.b16 %v253
    %v558 = vunpack.c.l.b16 %v254
    %v559 = vunpack.c.h.b16 %v254
    %v560 = vunpack.c.l.b16 %v255
    %v561 = vunpack.c.h.b16 %v255
    %v562 = vunpack.c.l.b16 %v256
    %v563 = vunpack.c.h.b16 %v256
    %v564 = vunpack.c.l.b16 %v257
    %v565 = vunpack.c.h.b16 %v257
    %v566 = vunpack.c.l.b16 %v258
    %v567 = vunpack.c.h.b16 %v258
    %v568 = vunpack.c.l.b16 %v259
    %v569 = vunpack.c.h.b16 %v259
    %v570 = vunpack.c.l.b16 %v260
    %v571 = vunpack.c.h.b16 %v260
    %v572 = vunpack.c.l.b16 %v261
    %v573 = vunpack.c.h.b16 %v261
    %v574 = vunpack.c.l.b16 %v262
    %v575 = vunpack.c.h.b16 %v262
    %v576 = vunpack.c.l.b16 %v263
    %v577 = vunpack.c.h.b16 %v263
    %v578 = vunpack.c.l.b16 %v264
    %v579 = vunpack.c.h.b16 %v264
    %v580 = vunpack.c.l.b16 %v265
    %v581 = vunpack.c.h.b16 %v265
    %v582 = vunpack.c.l.b16 %v266
    %v583 = vunpack.c.h.b16 %v266
    %v584 = vunpack.c.l.b16 %v267
    %v585 = vunpack.c.h.b16 %v267
    %v586 = vunpack.c.l.b16 %v268
    %v587 = vunpack.c.h.b16 %v268
    %v588 = vunpack.c.l.b16 %v269
    %v589 = vunpack.c.h.b16 %v269
    %v590 = vunpack.c.l.b16 %v270
    %v591 = vunpack.c.h.b16 %v270
    %v592 = vunpack.c.l.b16 %v271
    %v593 = vunpack.c.h.b16 %v271
    %v594 = vunpack.c.l.b16 %v272
    %v595 = vunpack.c.h.b16 %v272
    %v596 = vunpack.c.l.b16 %v273
    %v597 = vunpack.c.h.b16 %v273
    %v598 = vunpack.c.l.b16 %v274
    %v599 = vunpack.c.h.b16 %v274
    %v600 = vunpack.c.l.b16 %v275
    %v601 = vunpack.c.h.b16 %v275
    %v602 = vunpack.c.l.b16 %v276
    %v603 = vunpack.c.h.b16 %v276
    %v604 = vunpack.c.l.b16 %v277
    %v605 = vunpack.c.h.b16 %v277
    %v606 = vunpack.c.l.b16 %v278
    %v607 = vunpack.c.h.b16 %v278
    %v608 = vunpack.c.l.b16 %v279
    %v609 = vunpack.c.h.b16 %v279
    %v610 = vunpack.c.l.b16 %v280
    %v611 = vunpack.c.h.b16 %v280
    %v612 = vunpack.c.l.b16 %v281
    %v613 = vunpack.c.h.b16 %v281
    %v614 = vunpack.c.l.b16 %v282
    %v615 = vunpack.c.h.b16 %v282
    %v616 = vunpack.c.l.b16 %v283
    %v617 = vunpack.c.h.b16 %v283
    %v618 = vunpack.c.l.b16 %v284
    %v619 = vunpack.c.h.b16 %v284
    %v620 = vunpack.c.l.b16 %v285
    %v621 = vunpack.c.h.b16 %v285
    %v622 = vunpack.c.l.b16 %v286
    %v623 = vunpack.c.h.b16 %v286
    %v624 = vunpack.c.l.b16 %v287
    %v625 = vunpack.c.h.b16 %v287
    %v626 = vunpack.c.l.b16 %v288
    %v627 = vunpack.c.h.b16 %v288
    %v628 = vunpack.c.l.b16 %v289
    %v629 = vunpack.c.h.b16 %v289
    %v630 = vunpack.c.l.b16 %v290
    %v631 = vunpack.c.h.b16 %v290
    %v632 = vunpack.c.l.b16 %v291
    %v633 = vunpack.c.h.b16 %v291
    %v634 = vunpack.c.l.b16 %v292
    %v635 = vunpack.c.h.b16 %v292
    %v636 = vunpack.c.l.b16 %v293
    %v637 = vunpack.c.h.b16 %v293
    %v638 = vunpack.c.l.b16 %v294
    %v639 = vunpack.c.h.b16 %v294
    %v640 = vunpack.c.l.b16 %v295
    %v641 = vunpack.c.h.b16 %v295
    %v642 = vunpack.c.l.b16 %v296
    %v643 = vunpack.c.h.b16 %v296
    %v644 = vunpack.c.l.b16 %v297
    %v645 = vunpack.c.h.b16 %v297
    %v646 = vunpack.c.l.b16 %v298
    %v647 = vunpack.c.h.b16 %v298
    %v648 = vunpack.c.l.b16 %v299
    %v649 = vunpack.c.h.b16 %v299
    %v650 = vunpack.c.l.b16 %v300
    %v651 = vunpack.c.h.b16 %v300
    %v652 = vunpack.c.l.b16 %v301
    %v653 = vunpack.c.h.b16 %v301
    %v654 = vunpack.c.l.b16 %v302
    %v655 = vunpack.c.h.b16 %v302
    %v656 = vunpack.c.l.b16 %v303
    %v657 = vunpack.c.h.b16 %v303
    %v658 = vunpack.c.l.b16 %v304
    %v659 = vunpack.c.h.b16 %v304
    %v660 = vunpack.c.l.b16 %v305
    %v661 = vunpack.c.h.b16 %v305
    %v662 = vunpack.c.l.b16 %v306
    %v663 = vunpack.c.h.b16 %v306
    %v664 = vunpack.c.l.b16 %v307
    %v665 = vunpack.c.h.b16 %v307
    %v666 = vunpack.c.l.b16 %v308
    %v667 = vunpack.c.h.b16 %v308
    %v668 = vunpack.c.l.b16 %v309
    %v669 = vunpack.c.h.b16 %v309
    %v670 = vunpack.c.l.b16 %v310
    %v671 = vunpack.c.h.b16 %v310
    %v672 = vunpack.c.l.b16 %v311
    %v673 = vunpack.c.h.b16 %v311
    %v674 = vunpack.c.l.b16 %v312
    %v675 = vunpack.c.h.b16 %v312
    %v676 = vunpack.c.l.b16 %v313
    %v677 = vunpack.c.h.b16 %v313
    %v678 = vunpack.c.l.b16 %v314
    %v679 = vunpack.c.h.b16 %v314
    %v680 = vunpack.c.l.b16 %v315
    %v681 = vunpack.c.h.b16 %v315
    %v682 = vunpack.c.l.b16 %v316
    %v683 = vunpack.c.h.b16 %v316
    %v684 = vunpack.c.l.b16 %v317
    %v685 = vunpack.c.h.b16 %v317
    %v686 = vunpack.c.l.b16 %v318
    %v687 = vunpack.c.h.b16 %v318
    %v688 = vunpack.c.l.b16 %v319
    %v689 = vunpack.c.h.b16 %v319
    %v690 = vunpack.c.l.b16 %v320
    %v691 = vunpack.c.h.b16 %v320
    %v692 = vunpack.c.l.b16 %v321
    %v693 = vunpack.c.h.b16 %v321
    %v694 = vunpack.c.l.b16 %v322
    %v695 = vunpack.c.h.b16 %v322
    %v696 = vunpack.c.l.b16 %v323
    %v697 = vunpack.c.h.b16 %v323
    %v698 = vunpack.c.l.b16 %v324
    %v699 = vunpack.c.h.b16 %v324
    %v700 = vunpack.c.l.b16 %v325
    %v701 = vunpack.c.h.b16 %v325
    %v702 = vunpack.c.l.b16 %v326
    %v703 = vunpack.c.h.b16 %v326
    %v704 = vunpack.c.l.b16 %v327
    %v705 = vunpack.c.h.b16 %v327
    %v706 = vunpack.c.l.b16 %v328
    %v707 = vunpack.c.h.b16 %v328
    %v708 = vunpack.c.l.b16 %v329
    %v709 = vunpack.c.h.b16 %v329
    %v710 = vunpack.c.l.b16 %v330
    %v711 = vunpack.c.h.b16 %v330
    %v712 = vunpack.c.l.b16 %v331
    %v713 = vunpack.c.h.b16 %v331
    %v714 = vunpack.c.l.b16 %v332
    %v715 = vunpack.c.h.b16 %v332
    %v716 = vunpack.c.l.b16 %v333
    %v717 = vunpack.c.h.b16 %v333
    %v718 = vunpack.c.l.b16 %v334
    %v719 = vunpack.c.h.b16 %v334
    %v720 = vunpack.c.l.b16 %v335
    %v721 = vunpack.c.h.b16 %v335
    %v722 = vunpack.c.l.b16 %v336
    %v723 = vunpack.c.h.b16 %v336
    %v724 = vunpack.c.l.b16 %v337
    %v725 = vunpack.c.h.b16 %v337
    %v726 = vunpack.c.l.b16 %v338
    %v727 = vunpack.c.h.b16 %v338
    %v728 = vunpack.c.l.b16 %v339
    %v729 = vunpack.c.h.b16 %v339
    %v730 = vunpack.c.l.b16 %v340
    %v731 = vunpack.c.h.b16 %v340
    %v732 = vunpack.c.l.b16 %v341
    %v733 = vunpack.c.h.b16 %v341
    %v734 = vunpack.c.l.b16 %v342
    %v735 = vunpack.c.h.b16 %v342
    %v736 = vunpack.c.l.b16 %v343
    %v737 = vunpack.c.h.b16 %v343
    %v738 = vpack.c.b16 %v486, %v482
    %v739 = vpack.c.b16 %v487, %v483
    %v740 = vpack.c.b16 %v488, %v484
    %v741 = vpack.c.b16 %v489, %v485
    %v742 = vpack.c.b16 %v494, %v490
    %v743 = vpack.c.b16 %v495, %v491
    %v744 = vpack.c.b16 %v496, %v492
    %v745 = vpack.c.b16 %v497, %v493
    %v746 = vpack.c.b16 %v502, %v498
    %v747 = vpack.c.b16 %v503, %v499
    %v748 = vpack.c.b16 %v504, %v500
    %v749 = vpack.c.b16 %v505, %v501
    %v750 = vpack.c.b16 %v510, %v506
    %v751 = vpack.c.b16 %v511, %v507
    %v752 = vpack.c.b16 %v512, %v508
    %v753 = vpack.c.b16 %v513, %v509
    %v754 = vpack.c.b16 %v518, %v514
    %v755 = vpack.c.b16 %v519, %v515
    %v756 = vpack.c.b16 %v520, %v516
    %v757 = vpack.c.b16 %v521, %v517
    %v758 = vpack.c.b16 %v526, %v522
    %v759 = vpack.c.b16 %v527, %v523
    %v760 = vpack.c.b16 %v528, %v524
    %v761 = vpack.c.b16 %v529, %v525
    %v762 = vpack.c.b16 %v534, %v530
    %v763 = vpack.c.b16 %v535, %v531
    %v764 = vpack.c.b16 %v536, %v532
    %v765 = vpack.c.b16 %v537, %v533
    %v766 = vpack.c.b16 %v542, %v538
    %v767 = vpack.c.b16 %v543, %v539
    %v768 = vpack.c.b16 %v544, %v540
    %v769 = vpack.c.b16 %v545, %v541
    %v770 = vpack.c.b16 %v550, %v546
    %v771 = vpack.c.b16 %v551, %v547
    %v772 = vpack.c.b16 %v552, %v548
    %v773 = vpack.c.b16 %v553, %v549
    %v774 = vpack.c.b16 %v558, %v554
    %v775 = vpack.c.b16 %v559, %v555
    %v776 = vpack.c.b16 %v560, %v556
    %v777 = vpack.c.b16 %v561, %v557
    %v778 = vpack.c.b16 %v566, %v562
    %v779 = vpack.c.b16 %v567, %v563
    %v780 = vpack.c.b16 %v568, %v564
    %v781 = vpack.c.b16 %v569, %v565
    %v782 = vpack.c.b16 %v574, %v570
    %v783 = vpack.c.b16 %v575, %v571
    %v784 = vpack.c.b16 %v576, %v572
    %v785 = vpack.c.b16 %v577, %v573
    %v786 = vpack.c.b16 %v582, %v578
    %v787 = vpack.c.b16 %v583, %v579
    %v788 = vpack.c.b16 %v584, %v580
    %v789 = vpack.c.b16 %v585, %v581
    %v790 = vpack.c.b16 %v590, %v586
    %v791 = vpack.c.b16 %v591, %v587
    %v792 = vpack.c.b16 %v592, %v588
    %v793 = vpack.c.b16 %v593, %v589
    %v794 = vpack.c.b16 %v598, %v594
    %v795 = vpack.c.b16 %v599, %v595
    %v796 = vpack.c.b16 %v600, %v596
    %v797 = vpack.c.b16 %v601, %v597
    %v798 = vpack.c.b16 %v606, %v602
    %v799 = vpack.c.b16 %v607, %v603
    %v800 = vpack.c.b16 %v608, %v604
    %v801 = vpack.c.b16 %v609, %v605
    %v802 = vpack.c.b16 %v614, %v610
    %v803 = vpack.c.b16 %v615, %v611
    %v804 = vpack.c.b16 %v616, %v612
    %v805 = vpack.c.b16 %v617, %v613
    %v806 = vpack.c.b16 %v622, %v618
    %v807 = vpack.c.b16 %v623, %v619
    %v808 = vpack.c.b16 %v624, %v620
    %v809 = vpack.c.b16 %v625, %v621
    %v810 = vpack.c.b16 %v630, %v626
    %v811 = vpack.c.b16 %v631, %v627
    %v812 = vpack.c.b16 %v632, %v628
    %v813 = vpack.c.b16 %v633, %v629
    %v814 = vpack.c.b16 %v638, %v634
    %v815 = vpack.c.b16 %v639, %v635
    %v816 = vpack.c.b16 %v640, %v636
    %v817 = vpack.c.b16 %v641, %v637
    %v818 = vpack.c.b16 %v646, %v642
    %v819 = vpack.c.b16 %v647, %v643
    %v820 = vpack.c.b16 %v648, %v644
    %v821 = vpack.c.b16 %v649, %v645
    %v822 = vpack.c.b16 %v654, %v650
    %v823 = vpack.c.b16 %v655, %v651
    %v824 = vpack.c.b16 %v656, %v652
    %v825 = vpack.c.b16 %v657, %v653
    %v826 = vpack.c.b16 %v662, %v658
    %v827 = vpack.c.b16 %v663, %v659
    %v828 = vpack.c.b16 %v664, %v660
    %v829 = vpack.c.b16 %v665, %v661
    %v830 = vpack.c.b16 %v670, %v666
    %v831 = vpack.c.b16 %v671, %v667
    %v832 = vpack.c.b16 %v672, %v668
    %v833 = vpack.c.b16 %v673, %v669
    %v834 = vpack.c.b16 %v678, %v674
    %v835 = vpack.c.b16 %v679, %v675
    %v836 = vpack.c.b16 %v680, %v676
    %v837 = vpack.c.b16 %v681, %v677
    %v838 = vpack.c.b16 %v686, %v682
    %v839 = vpack.c.b16 %v687, %v683
    %v840 = vpack.c.b16 %v688, %v684
    %v841 = vpack.c.b16 %v689, %v685
    %v842 = vpack.c.b16 %v694, %v690
    %v843 = vpack.c.b16 %v695, %v691
    %v844 = vpack.c.b16 %v696, %v692
    %v845 = vpack.c.b16 %v697, %v693
    %v846 = vpack.c.b16 %v702, %v698
    %v847 = vpack.c.b16 %v703, %v699
    %v848 = vpack.c.b16 %v704, %v700
    %v849 = vpack.c.b16 %v705, %v701
    %v850 = vpack.c.b16 %v710, %v706
    %v851 = vpack.c.b16 %v711, %v707
    %v852 = vpack.c.b16 %v712, %v708
    %v853 = vpack.c.b16 %v713, %v709
    %v854 = vpack.c.b16 %v718, %v714
    %v855 = vpack.c.b16 %v719, %v715
    %v856 = vpack.c.b16 %v720, %v716
    %v857 = vpack.c.b16 %v721, %v717
    %v858 = vpack.c.b16 %v726, %v722
    %v859 = vpack.c.b16 %v727, %v723
    %v860 = vpack.c.b16 %v728, %v724
    %v861 = vpack.c.b16 %v729, %v725
    %v862 = vpack.c.b16 %v734, %v730
    %v863 = vpack.c.b16 %v735, %v731
    %v864 = vpack.c.b16 %v736, %v732
    %v865 = vpack.c.b16 %v737, %v733
    %994 = vmatpush.bf16.msra.mxu0 %v766
    %995 = vmatpush.bf16.msra.mxu0 %v762
    %996 = vmatpush.bf16.msra.mxu0 %v758
    %997 = vmatpush.bf16.msra.mxu0 %v754
    %998 = vmatpush.bf16.msra.mxu0 %v750
    %999 = vmatpush.bf16.msra.mxu0 %v746
    %1000 = vmatpush.bf16.msra.mxu0 %v742
    %1001 = vmatpush.bf16.msra.mxu0 %v738
    %1002 = vmatmul.bf16.gmra.mxu0 %v212
    %v1003 = vpop.f32.mrf.mxu0
    %v1004 = vadd.f32 %v346, %v1003
    %v1005 = vpop.f32.mrf.mxu0
    %1006 = vdwg.mxu0
    %1007 = vmatpush.bf16.msra.mxu0 %v798
    %1008 = vmatpush.bf16.msra.mxu0 %v794
    %1009 = vmatpush.bf16.msra.mxu0 %v790
    %1010 = vmatpush.bf16.msra.mxu0 %v786
    %1011 = vmatpush.bf16.msra.mxu0 %v782
    %1012 = vmatpush.bf16.msra.mxu0 %v778
    %1013 = vmatpush.bf16.msra.mxu0 %v774
    %1014 = vmatpush.bf16.msra.mxu0 %v770
    %1015 = vmatmul.bf16.gmra.mxu0 %v213
    %v1016 = vpop.f32.mrf.mxu0
    %v1017 = vadd.f32 %v1004, %v1016
    %v1018 = vpop.f32.mrf.mxu0
    %1019 = vdwg.mxu0
    %1020 = vmatpush.bf16.msra.mxu0 %v830
    %1021 = vmatpush.bf16.msra.mxu0 %v826
    %1022 = vmatpush.bf16.msra.mxu0 %v822
    %1023 = vmatpush.bf16.msra.mxu0 %v818
    %1024 = vmatpush.bf16.msra.mxu0 %v814
    %1025 = vmatpush.bf16.msra.mxu0 %v810
    %1026 = vmatpush.bf16.msra.mxu0 %v806
    %1027 = vmatpush.bf16.msra.mxu0 %v802
    %1028 = vmatmul.bf16.gmra.mxu0 %v214
    %v1029 = vpop.f32.mrf.mxu0
    %v1030 = vadd.f32 %v1017, %v1029
    %v1031 = vpop.f32.mrf.mxu0
    %1032 = vdwg.mxu0
    %1033 = vmatpush.bf16.msra.mxu0 %v862
    %1034 = vmatpush.bf16.msra.mxu0 %v858
    %1035 = vmatpush.bf16.msra.mxu0 %v854
    %1036 = vmatpush.bf16.msra.mxu0 %v850
    %1037 = vmatpush.bf16.msra.mxu0 %v846
    %1038 = vmatpush.bf16.msra.mxu0 %v842
    %1039 = vmatpush.bf16.msra.mxu0 %v838
    %1040 = vmatpush.bf16.msra.mxu0 %v834
    %1041 = vmatmul.bf16.gmra.mxu0 %v215
    %v1042 = vpop.f32.mrf.mxu0
    %v1043 = vadd.f32 %v1030, %v1042
    %v1044 = vpop.f32.mrf.mxu0
    %1045 = vdwg.mxu0
    %1046 = vmatpush.bf16.msra.mxu0 %v767
    %1047 = vmatpush.bf16.msra.mxu0 %v763
    %1048 = vmatpush.bf16.msra.mxu0 %v759
    %1049 = vmatpush.bf16.msra.mxu0 %v755
    %1050 = vmatpush.bf16.msra.mxu0 %v751
    %1051 = vmatpush.bf16.msra.mxu0 %v747
    %1052 = vmatpush.bf16.msra.mxu0 %v743
    %1053 = vmatpush.bf16.msra.mxu0 %v739
    %1054 = vmatmul.bf16.gmra.mxu0 %v212
    %v1055 = vpop.f32.mrf.mxu0
    %v1056 = vadd.f32 %v347, %v1055
    %v1057 = vpop.f32.mrf.mxu0
    %1058 = vdwg.mxu0
    %1059 = vmatpush.bf16.msra.mxu0 %v799
    %1060 = vmatpush.bf16.msra.mxu0 %v795
    %1061 = vmatpush.bf16.msra.mxu0 %v791
    %1062 = vmatpush.bf16.msra.mxu0 %v787
    %1063 = vmatpush.bf16.msra.mxu0 %v783
    %1064 = vmatpush.bf16.msra.mxu0 %v779
    %1065 = vmatpush.bf16.msra.mxu0 %v775
    %1066 = vmatpush.bf16.msra.mxu0 %v771
    %1067 = vmatmul.bf16.gmra.mxu0 %v213
    %v1068 = vpop.f32.mrf.mxu0
    %v1069 = vadd.f32 %v1056, %v1068
    %v1070 = vpop.f32.mrf.mxu0
    %1071 = vdwg.mxu0
    %1072 = vmatpush.bf16.msra.mxu0 %v831
    %1073 = vmatpush.bf16.msra.mxu0 %v827
    %1074 = vmatpush.bf16.msra.mxu0 %v823
    %1075 = vmatpush.bf16.msra.mxu0 %v819
    %1076 = vmatpush.bf16.msra.mxu0 %v815
    %1077 = vmatpush.bf16.msra.mxu0 %v811
    %1078 = vmatpush.bf16.msra.mxu0 %v807
    %1079 = vmatpush.bf16.msra.mxu0 %v803
    %1080 = vmatmul.bf16.gmra.mxu0 %v214
    %v1081 = vpop.f32.mrf.mxu0
    %v1082 = vadd.f32 %v1069, %v1081
    %v1083 = vpop.f32.mrf.mxu0
    %1084 = vdwg.mxu0
    %1085 = vmatpush.bf16.msra.mxu0 %v863
    %1086 = vmatpush.bf16.msra.mxu0 %v859
    %1087 = vmatpush.bf16.msra.mxu0 %v855
    %1088 = vmatpush.bf16.msra.mxu0 %v851
    %1089 = vmatpush.bf16.msra.mxu0 %v847
    %1090 = vmatpush.bf16.msra.mxu0 %v843
    %1091 = vmatpush.bf16.msra.mxu0 %v839
    %1092 = vmatpush.bf16.msra.mxu0 %v835
    %1093 = vmatmul.bf16.gmra.mxu0 %v215
    %v1094 = vpop.f32.mrf.mxu0
    %v1095 = vadd.f32 %v1082, %v1094
    %v1096 = vpop.f32.mrf.mxu0
    %1097 = vdwg.mxu0
    %1098 = vmatpush.bf16.msra.mxu0 %v768
    %1099 = vmatpush.bf16.msra.mxu0 %v764
    %1100 = vmatpush.bf16.msra.mxu0 %v760
    %1101 = vmatpush.bf16.msra.mxu0 %v756
    %1102 = vmatpush.bf16.msra.mxu0 %v752
    %1103 = vmatpush.bf16.msra.mxu0 %v748
    %1104 = vmatpush.bf16.msra.mxu0 %v744
    %1105 = vmatpush.bf16.msra.mxu0 %v740
    %1106 = vmatmul.bf16.gmra.mxu0 %v212
    %v1107 = vpop.f32.mrf.mxu0
    %v1108 = vadd.f32 %v348, %v1107
    %v1109 = vpop.f32.mrf.mxu0
    %1110 = vdwg.mxu0
    %1111 = vmatpush.bf16.msra.mxu0 %v800
    %1112 = vmatpush.bf16.msra.mxu0 %v796
    %1113 = vmatpush.bf16.msra.mxu0 %v792
    %1114 = vmatpush.bf16.msra.mxu0 %v788
    %1115 = vmatpush.bf16.msra.mxu0 %v784
    %1116 = vmatpush.bf16.msra.mxu0 %v780
    %1117 = vmatpush.bf16.msra.mxu0 %v776
    %1118 = vmatpush.bf16.msra.mxu0 %v772
    %1119 = vmatmul.bf16.gmra.mxu0 %v213
    %v1120 = vpop.f32.mrf.mxu0
    %v1121 = vadd.f32 %v1108, %v1120
    %v1122 = vpop.f32.mrf.mxu0
    %1123 = vdwg.mxu0
    %1124 = vmatpush.bf16.msra.mxu0 %v832
    %1125 = vmatpush.bf16.msra.mxu0 %v828
    %1126 = vmatpush.bf16.msra.mxu0 %v824
    %1127 = vmatpush.bf16.msra.mxu0 %v820
    %1128 = vmatpush.bf16.msra.mxu0 %v816
    %1129 = vmatpush.bf16.msra.mxu0 %v812
    %1130 = vmatpush.bf16.msra.mxu0 %v808
    %1131 = vmatpush.bf16.msra.mxu0 %v804
    %1132 = vmatmul.bf16.gmra.mxu0 %v214
    %v1133 = vpop.f32.mrf.mxu0
    %v1134 = vadd.f32 %v1121, %v1133
    %v1135 = vpop.f32.mrf.mxu0
    %1136 = vdwg.mxu0
    %1137 = vmatpush.bf16.msra.mxu0 %v864
    %1138 = vmatpush.bf16.msra.mxu0 %v860
    %1139 = vmatpush.bf16.msra.mxu0 %v856
    %1140 = vmatpush.bf16.msra.mxu0 %v852
    %1141 = vmatpush.bf16.msra.mxu0 %v848
    %1142 = vmatpush.bf16.msra.mxu0 %v844
    %1143 = vmatpush.bf16.msra.mxu0 %v840
    %1144 = vmatpush.bf16.msra.mxu0 %v836
    %1145 = vmatmul.bf16.gmra.mxu0 %v215
    %v1146 = vpop.f32.mrf.mxu0
    %v1147 = vadd.f32 %v1134, %v1146
    %v1148 = vpop.f32.mrf.mxu0
    %1149 = vdwg.mxu0
    %1150 = vmatpush.bf16.msra.mxu0 %v769
    %1151 = vmatpush.bf16.msra.mxu0 %v765
    %1152 = vmatpush.bf16.msra.mxu0 %v761
    %1153 = vmatpush.bf16.msra.mxu0 %v757
    %1154 = vmatpush.bf16.msra.mxu0 %v753
    %1155 = vmatpush.bf16.msra.mxu0 %v749
    %1156 = vmatpush.bf16.msra.mxu0 %v745
    %1157 = vmatpush.bf16.msra.mxu0 %v741
    %1158 = vmatmul.bf16.gmra.mxu0 %v212
    %v1159 = vpop.f32.mrf.mxu0
    %v1160 = vadd.f32 %v349, %v1159
    %v1161 = vpop.f32.mrf.mxu0
    %1162 = vdwg.mxu0
    %1163 = vmatpush.bf16.msra.mxu0 %v801
    %1164 = vmatpush.bf16.msra.mxu0 %v797
    %1165 = vmatpush.bf16.msra.mxu0 %v793
    %1166 = vmatpush.bf16.msra.mxu0 %v789
    %1167 = vmatpush.bf16.msra.mxu0 %v785
    %1168 = vmatpush.bf16.msra.mxu0 %v781
    %1169 = vmatpush.bf16.msra.mxu0 %v777
    %1170 = vmatpush.bf16.msra.mxu0 %v773
    %1171 = vmatmul.bf16.gmra.mxu0 %v213
    %v1172 = vpop.f32.mrf.mxu0
    %v1173 = vadd.f32 %v1160, %v1172
    %v1174 = vpop.f32.mrf.mxu0
    %1175 = vdwg.mxu0
    %1176 = vmatpush.bf16.msra.mxu0 %v833
    %1177 = vmatpush.bf16.msra.mxu0 %v829
    %1178 = vmatpush.bf16.msra.mxu0 %v825
    %1179 = vmatpush.bf16.msra.mxu0 %v821
    %1180 = vmatpush.bf16.msra.mxu0 %v817
    %1181 = vmatpush.bf16.msra.mxu0 %v813
    %1182 = vmatpush.bf16.msra.mxu0 %v809
    %1183 = vmatpush.bf16.msra.mxu0 %v805
    %1184 = vmatmul.bf16.gmra.mxu0 %v214
    %v1185 = vpop.f32.mrf.mxu0
    %v1186 = vadd.f32 %v1173, %v1185
    %v1187 = vpop.f32.mrf.mxu0
    %1188 = vdwg.mxu0
    %1189 = vmatpush.bf16.msra.mxu0 %v865
    %1190 = vmatpush.bf16.msra.mxu0 %v861
    %1191 = vmatpush.bf16.msra.mxu0 %v857
    %1192 = vmatpush.bf16.msra.mxu0 %v853
    %1193 = vmatpush.bf16.msra.mxu0 %v849
    %1194 = vmatpush.bf16.msra.mxu0 %v845
    %1195 = vmatpush.bf16.msra.mxu0 %v841
    %1196 = vmatpush.bf16.msra.mxu0 %v837
    %1197 = vmatmul.bf16.gmra.mxu0 %v215
    %v1198 = vpop.f32.mrf.mxu0
    %v1199 = vadd.f32 %v1186, %v1198
    %v1200 = vpop.f32.mrf.mxu0
    %1201 = vdwg.mxu0
    %v1202 = vmax.f32 %v1043, 0.0
    %v1203 = vmax.f32 %v1095, 0.0
    %v1204 = vmax.f32 %v1147, 0.0
    %v1205 = vmax.f32 %v1199, 0.0
    %v1206 = vpack.c.bf16 %v1202, %v1202
    %v1207 = vpack.c.bf16 %v1203, %v1203
    %v1208 = vpack.c.bf16 %v1204, %v1204
    %v1209 = vpack.c.bf16 %v1205, %v1205
    %v1210 = vld [vmem:[#allocation11] sm:$0xf]
    %v1211 = vld [vmem:[#allocation11 + $0x4] sm:$0xf]
    %v1212 = vld [vmem:[#allocation11 + $0x8] sm:$0xf]
    %v1213 = vld [vmem:[#allocation11 + $0xc] sm:$0xf]
    %v1214 = vld [vmem:[#allocation11 + $0x10] sm:$0xf]
    %v1215 = vld [vmem:[#allocation11 + $0x14] sm:$0xf]
    %v1216 = vld [vmem:[#allocation11 + $0x18] sm:$0xf]
    %v1217 = vld [vmem:[#allocation11 + $0x1c] sm:$0xf]
    %v1218 = vld [vmem:[#allocation11 + $0x20] sm:$0xf]
    %v1219 = vld [vmem:[#allocation11 + $0x24] sm:$0xf]
    %v1220 = vld [vmem:[#allocation11 + $0x28] sm:$0xf]
    %v1221 = vld [vmem:[#allocation11 + $0x2c] sm:$0xf]
    %v1222 = vld [vmem:[#allocation11 + $0x30] sm:$0xf]
    %v1223 = vld [vmem:[#allocation11 + $0x34] sm:$0xf]
    %v1224 = vld [vmem:[#allocation11 + $0x38] sm:$0xf]
    %v1225 = vld [vmem:[#allocation11 + $0x3c] sm:$0xf]
    %v1226 = vld [vmem:[#allocation11 + $0x40] sm:$0xf]
    %v1227 = vld [vmem:[#allocation11 + $0x44] sm:$0xf]
    %v1228 = vld [vmem:[#allocation11 + $0x48] sm:$0xf]
    %v1229 = vld [vmem:[#allocation11 + $0x4c] sm:$0xf]
    %v1230 = vld [vmem:[#allocation11 + $0x50] sm:$0xf]
    %v1231 = vld [vmem:[#allocation11 + $0x54] sm:$0xf]
    %v1232 = vld [vmem:[#allocation11 + $0x58] sm:$0xf]
    %v1233 = vld [vmem:[#allocation11 + $0x5c] sm:$0xf]
    %v1234 = vld [vmem:[#allocation11 + $0x60] sm:$0xf]
    %v1235 = vld [vmem:[#allocation11 + $0x64] sm:$0xf]
    %v1236 = vld [vmem:[#allocation11 + $0x68] sm:$0xf]
    %v1237 = vld [vmem:[#allocation11 + $0x6c] sm:$0xf]
    %v1238 = vld [vmem:[#allocation11 + $0x70] sm:$0xf]
    %v1239 = vld [vmem:[#allocation11 + $0x74] sm:$0xf]
    %v1240 = vld [vmem:[#allocation11 + $0x78] sm:$0xf]
    %v1241 = vld [vmem:[#allocation11 + $0x7c] sm:$0xf]
    %v1242 = vld [vmem:[#allocation11 + $0x80] sm:$0xf]
    %v1243 = vld [vmem:[#allocation11 + $0x84] sm:$0xf]
    %v1244 = vld [vmem:[#allocation11 + $0x88] sm:$0xf]
    %v1245 = vld [vmem:[#allocation11 + $0x8c] sm:$0xf]
    %v1246 = vld [vmem:[#allocation11 + $0x90] sm:$0xf]
    %v1247 = vld [vmem:[#allocation11 + $0x94] sm:$0xf]
    %v1248 = vld [vmem:[#allocation11 + $0x98] sm:$0xf]
    %v1249 = vld [vmem:[#allocation11 + $0x9c] sm:$0xf]
    %v1250 = vld [vmem:[#allocation11 + $0xa0] sm:$0xf]
    %v1251 = vld [vmem:[#allocation11 + $0xa4] sm:$0xf]
    %v1252 = vld [vmem:[#allocation11 + $0xa8] sm:$0xf]
    %v1253 = vld [vmem:[#allocation11 + $0xac] sm:$0xf]
    %v1254 = vld [vmem:[#allocation11 + $0xb0] sm:$0xf]
    %v1255 = vld [vmem:[#allocation11 + $0xb4] sm:$0xf]
    %v1256 = vld [vmem:[#allocation11 + $0xb8] sm:$0xf]
    %v1257 = vld [vmem:[#allocation11 + $0xbc] sm:$0xf]
    %v1258 = vld [vmem:[#allocation11 + $0xc0] sm:$0xf]
    %v1259 = vld [vmem:[#allocation11 + $0xc4] sm:$0xf]
    %v1260 = vld [vmem:[#allocation11 + $0xc8] sm:$0xf]
    %v1261 = vld [vmem:[#allocation11 + $0xcc] sm:$0xf]
    %v1262 = vld [vmem:[#allocation11 + $0xd0] sm:$0xf]
    %v1263 = vld [vmem:[#allocation11 + $0xd4] sm:$0xf]
    %v1264 = vld [vmem:[#allocation11 + $0xd8] sm:$0xf]
    %v1265 = vld [vmem:[#allocation11 + $0xdc] sm:$0xf]
    %v1266 = vld [vmem:[#allocation11 + $0xe0] sm:$0xf]
    %v1267 = vld [vmem:[#allocation11 + $0xe4] sm:$0xf]
    %v1268 = vld [vmem:[#allocation11 + $0xe8] sm:$0xf]
    %v1269 = vld [vmem:[#allocation11 + $0xec] sm:$0xf]
    %v1270 = vld [vmem:[#allocation11 + $0xf0] sm:$0xf]
    %v1271 = vld [vmem:[#allocation11 + $0xf4] sm:$0xf]
    %v1272 = vld [vmem:[#allocation11 + $0xf8] sm:$0xf]
    %v1273 = vld [vmem:[#allocation11 + $0xfc] sm:$0xf]
    %v1274 = vld [vmem:[%s6] sm:$0x1]
    %v1276 = vperm.slane %v1274, 0
    %v1342 = vunpack.c.l.b16 %v1210
    %v1343 = vunpack.c.l.b16 %v1211
    %v1344 = vunpack.c.l.b16 %v1212
    %v1345 = vunpack.c.l.b16 %v1213
    %v1346 = vunpack.c.l.b16 %v1214
    %v1347 = vunpack.c.l.b16 %v1215
    %v1348 = vunpack.c.l.b16 %v1216
    %v1349 = vunpack.c.l.b16 %v1217
    %v1350 = vunpack.c.l.b16 %v1218
    %v1351 = vunpack.c.l.b16 %v1219
    %v1352 = vunpack.c.l.b16 %v1220
    %v1353 = vunpack.c.l.b16 %v1221
    %v1354 = vunpack.c.l.b16 %v1222
    %v1355 = vunpack.c.l.b16 %v1223
    %v1356 = vunpack.c.l.b16 %v1224
    %v1357 = vunpack.c.l.b16 %v1225
    %v1358 = vunpack.c.l.b16 %v1226
    %v1359 = vunpack.c.l.b16 %v1227
    %v1360 = vunpack.c.l.b16 %v1228
    %v1361 = vunpack.c.l.b16 %v1229
    %v1362 = vunpack.c.l.b16 %v1230
    %v1363 = vunpack.c.l.b16 %v1231
    %v1364 = vunpack.c.l.b16 %v1232
    %v1365 = vunpack.c.l.b16 %v1233
    %v1366 = vunpack.c.l.b16 %v1234
    %v1367 = vunpack.c.l.b16 %v1235
    %v1368 = vunpack.c.l.b16 %v1236
    %v1369 = vunpack.c.l.b16 %v1237
    %v1370 = vunpack.c.l.b16 %v1238
    %v1371 = vunpack.c.l.b16 %v1239
    %v1372 = vunpack.c.l.b16 %v1240
    %v1373 = vunpack.c.l.b16 %v1241
    %v1374 = vunpack.c.l.b16 %v1242
    %v1375 = vunpack.c.l.b16 %v1243
    %v1376 = vunpack.c.l.b16 %v1244
    %v1377 = vunpack.c.l.b16 %v1245
    %v1378 = vunpack.c.l.b16 %v1246
    %v1379 = vunpack.c.l.b16 %v1247
    %v1380 = vunpack.c.l.b16 %v1248
    %v1381 = vunpack.c.l.b16 %v1249
    %v1382 = vunpack.c.l.b16 %v1250
    %v1383 = vunpack.c.l.b16 %v1251
    %v1384 = vunpack.c.l.b16 %v1252
    %v1385 = vunpack.c.l.b16 %v1253
    %v1386 = vunpack.c.l.b16 %v1254
    %v1387 = vunpack.c.l.b16 %v1255
    %v1388 = vunpack.c.l.b16 %v1256
    %v1389 = vunpack.c.l.b16 %v1257
    %v1390 = vunpack.c.l.b16 %v1258
    %v1391 = vunpack.c.l.b16 %v1259
    %v1392 = vunpack.c.l.b16 %v1260
    %v1393 = vunpack.c.l.b16 %v1261
    %v1394 = vunpack.c.l.b16 %v1262
    %v1395 = vunpack.c.l.b16 %v1263
    %v1396 = vunpack.c.l.b16 %v1264
    %v1397 = vunpack.c.l.b16 %v1265
    %v1398 = vunpack.c.l.b16 %v1266
    %v1399 = vunpack.c.l.b16 %v1267
    %v1400 = vunpack.c.l.b16 %v1268
    %v1401 = vunpack.c.l.b16 %v1269
    %v1402 = vunpack.c.l.b16 %v1270
    %v1403 = vunpack.c.l.b16 %v1271
    %v1404 = vunpack.c.l.b16 %v1272
    %v1405 = vunpack.c.l.b16 %v1273
    %v1406 = vpack.c.b16 %v1343, %v1342
    %v1407 = vpack.c.b16 %v1345, %v1344
    %v1408 = vpack.c.b16 %v1347, %v1346
    %v1409 = vpack.c.b16 %v1349, %v1348
    %v1410 = vpack.c.b16 %v1351, %v1350
    %v1411 = vpack.c.b16 %v1353, %v1352
    %v1412 = vpack.c.b16 %v1355, %v1354
    %v1413 = vpack.c.b16 %v1357, %v1356
    %v1414 = vpack.c.b16 %v1359, %v1358
    %v1415 = vpack.c.b16 %v1361, %v1360
    %v1416 = vpack.c.b16 %v1363, %v1362
    %v1417 = vpack.c.b16 %v1365, %v1364
    %v1418 = vpack.c.b16 %v1367, %v1366
    %v1419 = vpack.c.b16 %v1369, %v1368
    %v1420 = vpack.c.b16 %v1371, %v1370
    %v1421 = vpack.c.b16 %v1373, %v1372
    %v1422 = vpack.c.b16 %v1375, %v1374
    %v1423 = vpack.c.b16 %v1377, %v1376
    %v1424 = vpack.c.b16 %v1379, %v1378
    %v1425 = vpack.c.b16 %v1381, %v1380
    %v1426 = vpack.c.b16 %v1383, %v1382
    %v1427 = vpack.c.b16 %v1385, %v1384
    %v1428 = vpack.c.b16 %v1387, %v1386
    %v1429 = vpack.c.b16 %v1389, %v1388
    %v1430 = vpack.c.b16 %v1391, %v1390
    %v1431 = vpack.c.b16 %v1393, %v1392
    %v1432 = vpack.c.b16 %v1395, %v1394
    %v1433 = vpack.c.b16 %v1397, %v1396
    %v1434 = vpack.c.b16 %v1399, %v1398
    %v1435 = vpack.c.b16 %v1401, %v1400
    %v1436 = vpack.c.b16 %v1403, %v1402
    %v1437 = vpack.c.b16 %v1405, %v1404
    %1470 = vmatpush.bf16.msra.mxu0 %v1413
    %1471 = vmatpush.bf16.msra.mxu0 %v1412
    %1472 = vmatpush.bf16.msra.mxu0 %v1411
    %1473 = vmatpush.bf16.msra.mxu0 %v1410
    %1474 = vmatpush.bf16.msra.mxu0 %v1409
    %1475 = vmatpush.bf16.msra.mxu0 %v1408
    %1476 = vmatpush.bf16.msra.mxu0 %v1407
    %1477 = vmatpush.bf16.msra.mxu0 %v1406
    %1478 = vmatmul.bf16.gmra.mxu0 %v1206
    %v1479 = vpop.f32.mrf.mxu0
    %v1480 = vadd.f32 %v1276, %v1479
    %v1481 = vpop.f32.mrf.mxu0
    %1482 = vdwg.mxu0
    %1483 = vmatpush.bf16.msra.mxu0 %v1421
    %1484 = vmatpush.bf16.msra.mxu0 %v1420
    %1485 = vmatpush.bf16.msra.mxu0 %v1419
    %1486 = vmatpush.bf16.msra.mxu0 %v1418
    %1487 = vmatpush.bf16.msra.mxu0 %v1417
    %1488 = vmatpush.bf16.msra.mxu0 %v1416
    %1489 = vmatpush.bf16.msra.mxu0 %v1415
    %1490 = vmatpush.bf16.msra.mxu0 %v1414
    %1491 = vmatmul.bf16.gmra.mxu0 %v1207
    %v1492 = vpop.f32.mrf.mxu0
    %v1493 = vadd.f32 %v1480, %v1492
    %v1494 = vpop.f32.mrf.mxu0
    %1495 = vdwg.mxu0
    %1496 = vmatpush.bf16.msra.mxu0 %v1429
    %1497 = vmatpush.bf16.msra.mxu0 %v1428
    %1498 = vmatpush.bf16.msra.mxu0 %v1427
    %1499 = vmatpush.bf16.msra.mxu0 %v1426
    %1500 = vmatpush.bf16.msra.mxu0 %v1425
    %1501 = vmatpush.bf16.msra.mxu0 %v1424
    %1502 = vmatpush.bf16.msra.mxu0 %v1423
    %1503 = vmatpush.bf16.msra.mxu0 %v1422
    %1504 = vmatmul.bf16.gmra.mxu0 %v1208
    %v1505 = vpop.f32.mrf.mxu0
    %v1506 = vadd.f32 %v1493, %v1505
    %v1507 = vpop.f32.mrf.mxu0
    %1508 = vdwg.mxu0
    %1509 = vmatpush.bf16.msra.mxu0 %v1437
    %1510 = vmatpush.bf16.msra.mxu0 %v1436
    %1511 = vmatpush.bf16.msra.mxu0 %v1435
    %1512 = vmatpush.bf16.msra.mxu0 %v1434
    %1513 = vmatpush.bf16.msra.mxu0 %v1433
    %1514 = vmatpush.bf16.msra.mxu0 %v1432
    %1515 = vmatpush.bf16.msra.mxu0 %v1431
    %1516 = vmatpush.bf16.msra.mxu0 %v1430
    %1517 = vmatmul.bf16.gmra.mxu0 %v1209
    %v1518 = vpop.f32.mrf.mxu0
    %v1519 = vadd.f32 %v1506, %v1518
    %v1520 = vpop.f32.mrf.mxu0
    %1521 = vdwg.mxu0
    %v1522 = vtanh.pop %v1519
    %v1523 = vpack.c.bf16 %v1522, %v1522
    %1524 = vst [vmem:[#allocation13] sm:$0xf] %v1523
    // Predicated region
    $region54: #{tpu_custom_call.1} parent=1 // pred_check
      _
    $region55: #{tpu_custom_call.1} parent=1 // pred_check_branch
      %1526 = sbr.rel (0) target = $region57
    $region56: #{tpu_custom_call.1} parent=1 // pred_region
      %1528 = vsyncadd [#allocation4], 0
      %s1530 = sshll.u32 [#allocation13], 4
      %s1531 = int_to_ptr.vmem [resolvable:$true] %s1530
      %s1532 = sshll.u32 %s7, 4
      %s1533 = int_to_ptr.hbm [resolvable:$true] %s1532
      %1535 = dma.vmem_to_hbm [thread:$0]  %s1531, 64, %s1533, [#allocation4]
    $region57: #{tpu_custom_call.1} parent=1 // pred_fallthru
      _
    // Predicated region
    $region58: #{tpu_custom_call.1} parent=1 // pred_check
      _
    $region59: #{tpu_custom_call.1} parent=1 // pred_check_branch
      %1537 = sbr.rel (0) target = $region61
    $region60: #{tpu_custom_call.1} parent=1 // pred_region
      %1539 = dma.done [#allocation4], 64
    $region61: #{tpu_custom_call.1} parent=1 // pred_fallthru
      _
    %1540 = vsyncpa [#allocation3], 1
    %1541 = vsyncpa [#allocation6], 1
    %1542 = vsyncpa [#allocation9], 1
    %1543 = vsyncpa [#allocation12], 1
    %1544 = vsyncpa [#allocation4], 1

</llo_original>
